<compile_context>
chip_gen: v5e
topology: v5e:2x2
jax: 0.10.0
libtpu: 0.0.40
codegen_flags: <defaults>
</compile_context>

<pallas_src>
import functools

import jax
import jax.numpy as jnp
from jax.experimental import pallas as pl
from jax.experimental.pallas import tpu as pltpu


def _layernorm_kernel(x_ref, a_ref, b_ref, o_ref, *, eps):
    # x_ref : (tile_m, d_model)  row tile
    # a_ref : (1, d_model)       scale (a_2)
    # b_ref : (1, d_model)       shift (b_2)
    # o_ref : (tile_m, d_model)  output tile
    x = x_ref[...].astype(jnp.float32)
    d = x.shape[-1]
    mean = jnp.mean(x, axis=-1, keepdims=True)
    centered = x - mean
    # torch.std uses Bessel's correction (divide by d-1) by default.
    var = jnp.sum(centered * centered, axis=-1, keepdims=True) * (
        1.0 / max(d - 1, 1))
    std = jnp.sqrt(var)
    denom = std + eps
    # EUP reciprocal (own VLIW slot) + one Newton-Raphson step for f32 accuracy
    # instead of a VPU divide; only a (tile_m, 1) column is touched.
    inv = pl.reciprocal(denom, approx=True)
    inv = inv * (2.0 - denom * inv)
    y = a_ref[...].astype(jnp.float32) * (centered * inv) \
        + b_ref[...].astype(jnp.float32)
    o_ref[...] = y.astype(o_ref.dtype)


def _choose_tile_m(M, d_model, itemsize,
                   tile_budget_bytes=4 * 1024 * 1024, min_steps=8):
    """Row-tile size from a VMEM byte budget.

    ~tile_budget_bytes per block buffer => ~4x that with double-buffered
    in+out, which stays under the 32 MiB vmem_limit set below on every
    generation (v5e/v6e 128 MiB physical, v7x 64 MiB physical).  Also keeps
    >= min_steps grid steps when M is large enough so both v7x TensorCores
    get work and the pipeline has depth.
    """
    bytes_per_row = max(d_model * itemsize, 1)
    tile_from_budget = max(8, tile_budget_bytes // bytes_per_row)
    tile_from_steps = max(8, pl.cdiv(M, min_steps))
    tile_m = min(tile_from_budget, tile_from_steps)
    tile_m = max(8, (tile_m // 8) * 8)          # sublane-aligned
    tile_m = min(tile_m, pl.cdiv(M, 8) * 8)     # never exceed (rounded-up) M
    return tile_m


@functools.partial(jax.jit, static_argnames=("eps",))
def decoder_forward(x, memory, src_mask, tgt_mask, a_2, b_2, *, eps=1e-6):
    """Decoder.forward(x, memory, src_mask, tgt_mask) with the final LayerNorm
    computed by a Pallas TPU kernel.

    x: (batch, seq, d_model);  a_2, b_2: (d_model,) LayerNorm parameters.
    """
    # TODO(synk): the N cloned DecoderLayer blocks are abstract in the spec
    # (`layer` has no concrete forward), so they are not translated;
    # memory/src_mask/tgt_mask are accepted but unused.
    del memory, src_mask, tgt_mask

    batch, seq, d_model = x.shape
    M = batch * seq

    tile_m = _choose_tile_m(M, d_model, jnp.dtype(x.dtype).itemsize)
    grid_m = pl.cdiv(M, tile_m)   # partial final block is masked by Pallas

    x2d = x.reshape(M, d_model)
    a2d = a_2.reshape(1, d_model)
    b2d = b_2.reshape(1, d_model)

    out2d = pl.pallas_call(
        functools.partial(_layernorm_kernel, eps=eps),
        out_shape=jax.ShapeDtypeStruct((M, d_model), x.dtype),
        grid_spec=pltpu.PrefetchScalarGridSpec(
            num_scalar_prefetch=0,
            grid=(grid_m,),
            in_specs=[
                pl.BlockSpec((tile_m, d_model), lambda i: (i, 0)),
                pl.BlockSpec((1, d_model), lambda i: (0, 0)),
                pl.BlockSpec((1, d_model), lambda i: (0, 0)),
            ],
            out_specs=pl.BlockSpec((tile_m, d_model), lambda i: (i, 0)),
        ),
        compiler_params=pltpu.CompilerParams(
            dimension_semantics=("parallel",),
            vmem_limit_bytes=32 * 1024 * 1024,
        ),
    )(x2d, a2d, b2d)

    return out2d.reshape(batch, seq, d_model)


if __name__ == "__main__":
    # Small shapes consistent with the module: x is (batch, seq, d_model).
    batch, seq, d_model = 2, 8, 32

    key = jax.random.PRNGKey(0)
    kx, km, ka, kb = jax.random.split(key, 4)

    x = jax.random.normal(kx, (batch, seq, d_model), jnp.float32)
    memory = jax.random.normal(km, (batch, seq, d_model), jnp.float32)
    src_mask = jnp.ones((batch, 1, seq), jnp.float32)
    tgt_mask = jnp.ones((batch, seq, seq), jnp.float32)

    # LayerNorm params (module inits a_2=ones, b_2=zeros; use random values so
    # the affine path is actually exercised — still deterministic).
    a_2 = 1.0 + 0.1 * jax.random.normal(ka, (d_model,), jnp.float32)
    b_2 = 0.1 * jax.random.normal(kb, (d_model,), jnp.float32)

    out = decoder_forward(x, memory, src_mask, tgt_mask, a_2, b_2)
    out = jax.block_until_ready(out)

    # Plain-JAX reference matching the PyTorch math (unbiased std, /(std+eps)).
    mean = jnp.mean(x, axis=-1, keepdims=True)
    std = jnp.sqrt(jnp.sum((x - mean) ** 2, axis=-1, keepdims=True) / (d_model - 1))
    ref = a_2 * (x - mean) / (std + 1e-6) + b_2

    assert out.shape == (batch, seq, d_model)
    assert jnp.allclose(out, ref, atol=1e-4, rtol=1e-4), "mismatch vs reference"

    print("KERNEL_OK")
</pallas_src>

<mosaic_0001>
module attributes {stable_mosaic.version = 11 : i64} {
  func.func @_layernorm_kernel(%arg0: i32, %arg1: memref<8x32xf32, #tpu.memory_space<vmem>>, %arg2: memref<1x32xf32, #tpu.memory_space<vmem>>, %arg3: memref<1x32xf32, #tpu.memory_space<vmem>>, %arg4: memref<8x32xf32, #tpu.memory_space<vmem>>) attributes {dimension_semantics = [#tpu.dimension_semantics<parallel>], iteration_bounds = array<i64: 2>, scalar_prefetch = 0 : i64, scratch_operands = 0 : i64, tpu.core_type = #tpu.core_type<tc>, window_params = [{transform_indices = @transform_0, window_bounds = array<i64: 8, 32>}, {pipeline_mode = #tpu.pipeline_mode<synchronous>, transform_indices = @transform_1, window_bounds = array<i64: 1, 32>}, {pipeline_mode = #tpu.pipeline_mode<synchronous>, transform_indices = @transform_2, window_bounds = array<i64: 1, 32>}, {transform_indices = @transform_3, window_bounds = array<i64: 8, 32>}]} {
    %c0 = arith.constant 0 : index
    %c0_0 = arith.constant 0 : index
    %0 = vector.load %arg1[%c0, %c0_0] : memref<8x32xf32, #tpu.memory_space<vmem>>, vector<8x32xf32>
    %cst = arith.constant dense<0.000000e+00> : vector<8xf32>
    %1 = vector.multi_reduction <add>, %0, %cst [1] : vector<8x32xf32> to vector<8xf32>
    %2 = vector.shape_cast %1 : vector<8xf32> to vector<8x1xf32>
    %cst_1 = arith.constant 3.200000e+01 : f32
    %3 = vector.broadcast %cst_1 : f32 to vector<8x1xf32>
    %4 = arith.divf %2, %3 : vector<8x1xf32>
    %5 = vector.broadcast %4 : vector<8x1xf32> to vector<8x32xf32>
    %6 = arith.subf %0, %5 : vector<8x32xf32>
    %7 = arith.mulf %6, %6 : vector<8x32xf32>
    %cst_2 = arith.constant dense<0.000000e+00> : vector<8xf32>
    %8 = vector.multi_reduction <add>, %7, %cst_2 [1] : vector<8x32xf32> to vector<8xf32>
    %9 = vector.shape_cast %8 : vector<8xf32> to vector<8x1xf32>
    %cst_3 = arith.constant 0.0322580636 : f32
    %10 = vector.broadcast %cst_3 : f32 to vector<8x1xf32>
    %11 = arith.mulf %9, %10 : vector<8x1xf32>
    %12 = math.sqrt %11 : vector<8x1xf32>
    %cst_4 = arith.constant 9.99999997E-7 : f32
    %13 = vector.broadcast %cst_4 : f32 to vector<8x1xf32>
    %14 = arith.addf %12, %13 : vector<8x1xf32>
    %15 = tpu.reciprocal %14 {approx = true} : vector<8x1xf32> -> vector<8x1xf32>
    %16 = arith.mulf %14, %15 : vector<8x1xf32>
    %cst_5 = arith.constant 2.000000e+00 : f32
    %17 = vector.broadcast %cst_5 : f32 to vector<8x1xf32>
    %18 = arith.subf %17, %16 : vector<8x1xf32>
    %19 = arith.mulf %15, %18 : vector<8x1xf32>
    %c0_6 = arith.constant 0 : index
    %c0_7 = arith.constant 0 : index
    %20 = vector.load %arg2[%c0_6, %c0_7] : memref<1x32xf32, #tpu.memory_space<vmem>>, vector<1x32xf32>
    %21 = vector.broadcast %19 : vector<8x1xf32> to vector<8x32xf32>
    %22 = arith.mulf %6, %21 : vector<8x32xf32>
    %23 = vector.broadcast %20 : vector<1x32xf32> to vector<8x32xf32>
    %24 = arith.mulf %23, %22 : vector<8x32xf32>
    %c0_8 = arith.constant 0 : index
    %c0_9 = arith.constant 0 : index
    %25 = vector.load %arg3[%c0_8, %c0_9] : memref<1x32xf32, #tpu.memory_space<vmem>>, vector<1x32xf32>
    %26 = vector.broadcast %25 : vector<1x32xf32> to vector<8x32xf32>
    %27 = arith.addf %24, %26 : vector<8x32xf32>
    %c0_10 = arith.constant 0 : index
    %c0_11 = arith.constant 0 : index
    %28 = vector.load %arg4[%c0_10, %c0_11] : memref<8x32xf32, #tpu.memory_space<vmem>>, vector<8x32xf32>
    tpu.vector_store %arg4[%c0_10, %c0_11], %27 {strides = array<i32>} : memref<8x32xf32, #tpu.memory_space<vmem>>, vector<8x32xf32>,
    return
  }
  func.func @transform_0(%arg0: i32) -> (i32, i32) {
    %c0_i32 = arith.constant 0 : i32
    %c0_i32_0 = arith.constant 0 : i32
    return %arg0, %c0_i32 : i32, i32
  }
  func.func @transform_1(%arg0: i32) -> (i32, i32) {
    %c0_i32 = arith.constant 0 : i32
    %c0_i32_0 = arith.constant 0 : i32
    %c0_i32_1 = arith.constant 0 : i32
    return %c0_i32, %c0_i32_0 : i32, i32
  }
  func.func @transform_2(%arg0: i32) -> (i32, i32) {
    %c0_i32 = arith.constant 0 : i32
    %c0_i32_0 = arith.constant 0 : i32
    %c0_i32_1 = arith.constant 0 : i32
    return %c0_i32, %c0_i32_0 : i32, i32
  }
  func.func @transform_3(%arg0: i32) -> (i32, i32) {
    %c0_i32 = arith.constant 0 : i32
    %c0_i32_0 = arith.constant 0 : i32
    return %arg0, %c0_i32 : i32, i32
  }
}

</mosaic_0001>

<llo_original>
// kernel: decoder_forward.1
$region0: #{decoder_forward.1}
  #allocation0 [shape = 'u32[]', space=smem, size = 0x4, offset = 0x4, fixed_abs, tag = 'smem constant byte address 0x4 - core index']
  #allocation1 [shape = 'u32[72,128]{1,0:T(1,128)}', space=vmem, size = 0x9000, scoped, tag = 'internal scratch']
  %s0 = inlined_call_operand.hbm [shape: f32[16,32], index: 0, kind: input, shape index: {}]
  %s1 = inlined_call_operand.vmem [shape: f32[1,32], index: 1, kind: input, shape index: {}]
  %s2 = inlined_call_operand.vmem [shape: f32[1,32], index: 2, kind: input, shape index: {}]
  %s3 = inlined_call_operand.hbm [shape: f32[16,32], index: 3, kind: output, shape index: {}]
  %s4 = sld [smem:[#allocation0]]
  $region49: #{decoder_forward.1} parent=0
    _
  %s6 = ssub.s32 1, %s4
  %s7 = scalar_select 0, %s6, %s4
  $region1: #{decoder_forward.1} parent=0
    #allocation2 [shape = 'u8[8192]{0}', space=vmem, size = 0x2000, scoped, tag = 'input window, operand 0']
    #allocation3 [shape = 's32[2]{0}', space=sflag, size = 0x8, scoped, tag = 'scoped memory for decoder_forward.1']
    #allocation4 [shape = 's32[2]{0}', space=sflag, size = 0x8, scoped, tag = 'scoped memory for decoder_forward.1']
    #allocation5 [shape = 'u8[8192]{0}', space=vmem, size = 0x2000, scoped, tag = 'output window, operand 0']
    %8 = vsyncpa [#allocation3], 0
    %s9 = scalar_lea.sflag [#allocation3], 1
    %10 = vsyncpa %s9, 0
    %11 = vsyncpa [#allocation4], 0
    %s12 = scalar_lea.sflag [#allocation4], 1
    %13 = vsyncpa %s12, 0
    loop: start=0, step=1, limit=4
    $region2: #{decoder_forward.1} parent=1 // loop_pre_header
      _
    $region3: #{decoder_forward.1} parent=1 // loop_header
      %s15 = sphi 0, %s19
      %p16 = scmp.ge.s32.totalorder %s15, 4
      %s25 = sphi 0, %s27
      %s28 = sphi 0, %s25
      %s29 = sphi 0, %s28
      %s45 = sphi 0, %s29
      %s49 = sphi 0, %s49
      %s51 = sphi 0, %s49
      %s52 = sphi 0, %s51
      %s66 = sphi 0, %s52
      %s70 = sphi 0, %s70
      %s72 = sphi 0, %s70
      %s73 = sphi 0, %s72
      %s87 = sphi 0, %s73
      %s93 = sphi 0, %s95
      %s96 = sphi 0, %s93
      %s97 = sphi 0, %s96
      %s113 = sphi 0, %s97
    $region4: #{decoder_forward.1} parent=1 // loop_header_branch
      %18 = sbr.rel (%p16) target = $region8
    $region5: #{decoder_forward.1} parent=1 // loop_body
      %s20 = ssub.s32 %s15, 1
      %s21 = ssub.s32 %s15, 2
      %s22 = sadd.s32 %s15, 1
      %s23 = ssub.s32 %s15, %s22
      %p24 = scmp.eq.s32.totalorder %s23, 0
      %s26 = sadd.s32 %s25, 1
      %s27 = scalar_select %p24, %s25, %s26
      %p30 = pneg %p24
      %p31 = scmp.eq.s32.totalorder %s15, 1
      %p32 = por %p30, %p31
      %p33 = scmp.ne.s32.totalorder %s25, %s28
      %p34 = scmp.eq.s32.totalorder %s15, 0
      %p35 = por %p33, %p34
      %p36 = scmp.ne.s32.totalorder %s25, %s28
      %p37 = scmp.eq.s32.totalorder %s20, 1
      %p38 = por %p36, %p37
      %p39 = scmp.ne.s32.totalorder %s28, %s29
      %p40 = scmp.eq.s32.totalorder %s20, 0
      %p41 = por %p39, %p40
      %p42 = scmp.ne.s32.totalorder %s28, %s29
      %p43 = scmp.eq.s32.totalorder %s21, 1
      %p44 = por %p42, %p43
      %p46 = scmp.ne.s32.totalorder %s29, %s45
      %p47 = scmp.eq.s32.totalorder %s21, 0
      %p48 = por %p46, %p47
      %s50 = sadd.s32 %s49, 1
      %p53 = scmp.eq.s32.totalorder %s15, 1
      %p54 = scmp.ne.s32.totalorder %s49, %s51
      %p55 = scmp.eq.s32.totalorder %s15, 0
      %p56 = por %p54, %p55
      %p57 = scmp.ne.s32.totalorder %s49, %s51
      %p58 = scmp.eq.s32.totalorder %s20, 1
      %p59 = por %p57, %p58
      %p60 = scmp.ne.s32.totalorder %s51, %s52
      %p61 = scmp.eq.s32.totalorder %s20, 0
      %p62 = por %p60, %p61
      %p63 = scmp.ne.s32.totalorder %s51, %s52
      %p64 = scmp.eq.s32.totalorder %s21, 1
      %p65 = por %p63, %p64
      %p67 = scmp.ne.s32.totalorder %s52, %s66
      %p68 = scmp.eq.s32.totalorder %s21, 0
      %p69 = por %p67, %p68
      %s71 = sadd.s32 %s70, 1
      %p74 = scmp.eq.s32.totalorder %s15, 1
      %p75 = scmp.ne.s32.totalorder %s70, %s72
      %p76 = scmp.eq.s32.totalorder %s15, 0
      %p77 = por %p75, %p76
      %p78 = scmp.ne.s32.totalorder %s70, %s72
      %p79 = scmp.eq.s32.totalorder %s20, 1
      %p80 = por %p78, %p79
      %p81 = scmp.ne.s32.totalorder %s72, %s73
      %p82 = scmp.eq.s32.totalorder %s20, 0
      %p83 = por %p81, %p82
      %p84 = scmp.ne.s32.totalorder %s72, %s73
      %p85 = scmp.eq.s32.totalorder %s21, 1
      %p86 = por %p84, %p85
      %p88 = scmp.ne.s32.totalorder %s73, %s87
      %p89 = scmp.eq.s32.totalorder %s21, 0
      %p90 = por %p88, %p89
      %s91 = ssub.s32 %s15, %s22
      %p92 = scmp.eq.s32.totalorder %s91, 0
      %s94 = sadd.s32 %s93, 1
      %s95 = scalar_select %p92, %s93, %s94
      %p98 = pneg %p92
      %p99 = scmp.eq.s32.totalorder %s15, 1
      %p100 = por %p98, %p99
      %p101 = scmp.ne.s32.totalorder %s93, %s96
      %p102 = scmp.eq.s32.totalorder %s15, 0
      %p103 = por %p101, %p102
      %p104 = scmp.ne.s32.totalorder %s93, %s96
      %p105 = scmp.eq.s32.totalorder %s20, 1
      %p106 = por %p104, %p105
      %p107 = scmp.ne.s32.totalorder %s96, %s97
      %p108 = scmp.eq.s32.totalorder %s20, 0
      %p109 = por %p107, %p108
      %p110 = scmp.ne.s32.totalorder %s96, %s97
      %p111 = scmp.eq.s32.totalorder %s21, 1
      %p112 = por %p110, %p111
      %p114 = scmp.ne.s32.totalorder %s97, %s113
      %p115 = scmp.eq.s32.totalorder %s21, 0
      %p116 = por %p114, %p115
      %p117 = scmp.le.s32.totalorder 1, %s15
      %p118 = scmp.lt.s32.totalorder %s15, 3
      %p119 = pnand %p117, %p118
      %p120 = pneg %p119
      // Predicated region
      $region9: #{decoder_forward.1} parent=5 // pred_check
        _
      $region10: #{decoder_forward.1} parent=5 // pred_check_branch
        %122 = sbr.rel (%p119) target = $region12
      $region11: #{decoder_forward.1} parent=5 // pred_region
        %s123 = ssub.s32 %s15, 1
        // Predicated region
        $region13: #{decoder_forward.1} parent=11 // pred_check
          %p124 = pneg %p62
        $region14: #{decoder_forward.1} parent=11 // pred_check_branch
          %126 = sbr.rel (%p124) target = $region16
        $region15: #{decoder_forward.1} parent=11 // pred_region
          _
        $region16: #{decoder_forward.1} parent=11 // pred_fallthru
          _
        // Predicated region
        $region17: #{decoder_forward.1} parent=11 // pred_check
          %p127 = pneg %p83
        $region18: #{decoder_forward.1} parent=11 // pred_check_branch
          %129 = sbr.rel (%p127) target = $region20
        $region19: #{decoder_forward.1} parent=11 // pred_region
          _
        $region20: #{decoder_forward.1} parent=11 // pred_fallthru
          _
      $region12: #{decoder_forward.1} parent=5 // pred_fallthru
        _
      %p130 = scmp.lt.s32.totalorder %s15, 2
      // Predicated region
      $region21: #{decoder_forward.1} parent=5 // pred_check
        %p131 = pneg %p130
      $region22: #{decoder_forward.1} parent=5 // pred_check_branch
        %133 = sbr.rel (%p131) target = $region24
      $region23: #{decoder_forward.1} parent=5 // pred_region
        // Predicated region
        $region25: #{decoder_forward.1} parent=23 // pred_check
          %p134 = pneg %p35
        $region26: #{decoder_forward.1} parent=23 // pred_check_branch
          %136 = sbr.rel (%p134) target = $region28
        $region27: #{decoder_forward.1} parent=23 // pred_region
          %s137 = sand.u32 %s25, 1
          %s138 = scalar_lea.sflag [#allocation3], %s137
          %s139 = sand.u32 %s25, 1
          %s140 = smul.addr %s139, 8
          %s141 = scalar_lea.vmem [#allocation2], %s140
          %143 = vsyncadd %s138, 0
          %s144 = smul.addr %s15, 8
          %s145 = scalar_lea.hbm %s0, %s144
          %s147 = sshll.u32 %s145, 4
          %s148 = int_to_ptr.hbm [resolvable:$true] %s147
          %s149 = sshll.u32 %s141, 4
          %s150 = int_to_ptr.vmem [resolvable:$true] %s149
          %152 = dma.hbm_to_vmem [thread:$0]  %s148, 128, %s150, %s138
        $region28: #{decoder_forward.1} parent=23 // pred_fallthru
          _
      $region24: #{decoder_forward.1} parent=5 // pred_fallthru
        _
      %p153 = scmp.le.s32.totalorder 1, %s15
      %p154 = scmp.lt.s32.totalorder %s15, 3
      %p155 = pnand %p153, %p154
      %p156 = pneg %p155
      // Predicated region
      $region29: #{decoder_forward.1} parent=5 // pred_check
        _
      $region30: #{decoder_forward.1} parent=5 // pred_check_branch
        %158 = sbr.rel (%p155) target = $region32
      $region31: #{decoder_forward.1} parent=5 // pred_region
        %s159 = ssub.s32 %s15, 1
        %s160 = sand.u32 %s28, 1
        %s161 = scalar_lea.sflag [#allocation3], %s160
        %s162 = sand.u32 %s28, 1
        %s163 = smul.addr %s162, 8
        %s164 = scalar_lea.vmem [#allocation2], %s163
        // Predicated region
        $region33: #{decoder_forward.1} parent=31 // pred_check
          %p165 = pneg %p41
        $region34: #{decoder_forward.1} parent=31 // pred_check_branch
          %167 = sbr.rel (%p165) target = $region36
        $region35: #{decoder_forward.1} parent=31 // pred_region
          %169 = dma.done %s161, 128
        $region36: #{decoder_forward.1} parent=31 // pred_fallthru
          _
        %s170 = sand.u32 %s28, 1
        %s171 = scalar_lea.sflag [#allocation3], %s170
        %s172 = sand.u32 %s28, 1
        %s173 = smul.addr %s172, 8
        %s174 = scalar_lea.vmem [#allocation2], %s173
        %p175 = pneg %p41
        %p176 = pneg %p38
        %p177 = pneg %p62
        %p178 = pneg %p59
        %p179 = pneg %p83
        %p180 = pneg %p80
        %p181 = pneg %p109
        %p182 = pneg %p106
        %s183 = sand.u32 %s96, 1
        %s184 = scalar_lea.sflag [#allocation4], %s183
        %s185 = sand.u32 %s96, 1
        %s186 = smul.addr %s185, 8
        %s187 = scalar_lea.vmem [#allocation5], %s186
        %v188 = vld [vmem:[%s164] sm:$0xff]
        %vm189 = vcmask 261120
        %v190 = vsel %vm189, %v188, 0.0
        %191 = vadd.xlane.f32.xlu0 %v190
        %v192 = vpop.xlane.xlu0 %191
        %v193 = vrcp.pop 32.0
        %v194 = vmul.f32 32.0, %v193
        %v195 = vsub.f32 1.0, %v194
        %v196 = vmul.f32 %v193, %v195
        %v197 = vadd.f32 %v193, %v196
        %vm198 = vweird.f32 %v193
        %v199 = vsel %vm198, %v193, %v197
        %v200 = vmul.f32 %v192, %v199
        %v201 = vsub.f32 %v188, %v200
        %v202 = vmul.f32 %v201, %v201
        %v203 = vsel %vm189, %v202, 0.0
        %204 = vadd.xlane.f32.xlu0 %v203
        %v205 = vpop.xlane.xlu0 %204
        %v206 = vmul.f32 %v205, 0.032258064
        %v207 = vrsqrt.pop %v206
        %v208 = vmul.f32 %v207, %v206
        %v209 = vmul.f32 %v208, %v207
        %v210 = vmul.f32 0.5, %v209
        %v211 = vsub.f32 1.5, %v210
        %v212 = vmul.f32 %v207, %v211
        %v213 = vmul.f32 %v206, %v212
        %vm214 = vcmp.eq.f32.partialorder %v206, inf
        %v215 = vsel %vm214, %v206, %v213
        %vm216 = vcmp.eq.f32.partialorder %v206, 0.0
        %v217 = vand.u32 %v206, 2147483648
        %v218 = vsel %vm216, %v217, %v215
        %v219 = vadd.f32 %v218, 1e-06
        %v220 = vrcp.pop %v219
        %v221 = vmul.f32 %v219, %v220
        %v222 = vsub.f32 2.0, %v221
        %v223 = vmul.f32 %v220, %v222
        %v224 = vld [vmem:[%s1] sm:$0x1]
        %v225 = vmul.f32 %v201, %v223
        %v227 = vperm.slane %v224, 0
        %v229 = vmul.f32 %v227, %v225
        %v230 = vld [vmem:[%s2] sm:$0x1]
        %v232 = vperm.slane %v230, 0
        %v234 = vadd.f32 %v229, %v232
        %235 = vst.msk [vmem:[%s187] sm:$0xff] %vm189, %v234
        %s236 = sand.u32 %s96, 1
        %s237 = scalar_lea.sflag [#allocation4], %s236
        %s238 = sand.u32 %s96, 1
        %s239 = smul.addr %s238, 8
        %s240 = scalar_lea.vmem [#allocation5], %s239
        // Predicated region
        $region37: #{decoder_forward.1} parent=31 // pred_check
          %p241 = pneg %p106
        $region38: #{decoder_forward.1} parent=31 // pred_check_branch
          %243 = sbr.rel (%p241) target = $region40
        $region39: #{decoder_forward.1} parent=31 // pred_region
          %245 = vsyncadd %s237, 0
          %s246 = smul.addr %s20, 8
          %s247 = scalar_lea.hbm %s3, %s246
          %s249 = sshll.u32 %s240, 4
          %s250 = int_to_ptr.vmem [resolvable:$true] %s249
          %s251 = sshll.u32 %s247, 4
          %s252 = int_to_ptr.hbm [resolvable:$true] %s251
          %254 = dma.vmem_to_hbm [thread:$0]  %s250, 128, %s252, %s237
        $region40: #{decoder_forward.1} parent=31 // pred_fallthru
          _
      $region32: #{decoder_forward.1} parent=5 // pred_fallthru
        _
      %p255 = scmp.le.s32.totalorder 2, %s15
      // Predicated region
      $region41: #{decoder_forward.1} parent=5 // pred_check
        %p256 = pneg %p255
      $region42: #{decoder_forward.1} parent=5 // pred_check_branch
        %258 = sbr.rel (%p256) target = $region44
      $region43: #{decoder_forward.1} parent=5 // pred_region
        %s259 = ssub.s32 %s15, 2
        // Predicated region
        $region45: #{decoder_forward.1} parent=43 // pred_check
          %p260 = pneg %p112
        $region46: #{decoder_forward.1} parent=43 // pred_check_branch
          %262 = sbr.rel (%p260) target = $region48
        $region47: #{decoder_forward.1} parent=43 // pred_region
          %s263 = sand.u32 %s97, 1
          %s264 = scalar_lea.sflag [#allocation4], %s263
          %s265 = sand.u32 %s97, 1
          %s266 = smul.addr %s265, 8
          %s267 = scalar_lea.vmem [#allocation5], %s266
          %269 = dma.done %s264, 128
        $region48: #{decoder_forward.1} parent=43 // pred_fallthru
          _
      $region44: #{decoder_forward.1} parent=5 // pred_fallthru
        _
    $region6: #{decoder_forward.1} parent=1 // loop_footer
      %s19 = sadd.s32 1, %s15
    $region7: #{decoder_forward.1} parent=1 // loop_footer_branch
      %14 = sbr.rel target = $region3
    $region8: #{decoder_forward.1} parent=1 // loop_exit
      _
    %270 = vsyncpa [#allocation3], 1
    %s271 = scalar_lea.sflag [#allocation3], 1
    %272 = vsyncpa %s271, 1
    %273 = vsyncpa [#allocation4], 1
    %s274 = scalar_lea.sflag [#allocation4], 1
    %275 = vsyncpa %s274, 1

</llo_original>
